<compile_context>
chip_gen: v7x
topology: tpu7x:2x2x1
jax: 0.10.0
libtpu: 0.0.40
codegen_flags: <defaults>
</compile_context>

<pallas_src>
import functools

import jax
import jax.numpy as jnp
from jax import lax
from jax.experimental import pallas as pl
from jax.experimental.pallas import tpu as pltpu

EPS = 1e-5  # torch.nn.InstanceNorm2d default eps


def _round_up(a, b):
    return (a + b - 1) // b * b


def _vmem_capacity_bytes(default=64 * 2**20):
    """Per-generation VMEM capacity; conservative (v7x) fallback."""
    try:
        info = pltpu.get_tpu_info()
        for name in ("vmem_capacity_bytes", "vmem_bytes", "vmem_size_bytes"):
            v = getattr(info, name, None)
            if v:
                return int(v)
    except Exception:
        pass
    return default


def _per_step_vmem_bytes(tile, C, rc, in_itemsize, out_itemsize, compute_itemsize):
    """Rough per-grid-step VMEM working set for tile selection."""
    f32 = 4
    c5 = 5 * rc
    x_bufs = 2 * C * tile * in_itemsize            # double-buffered x tiles
    u_bufs = 2 * 4 * tile * f32                    # double-buffered u tiles
    o_bufs = 2 * C * tile * out_itemsize           # double-buffered out tiles
    weights = 2 * (2 * c5 * C * compute_itemsize + C * f32)
    interm = tile * (f32 * (3 * c5 + C) + compute_itemsize * (C + c5))
    scratch = 2 * _round_up(c5, 8) * 128 * f32
    return x_bufs + u_bufs + o_bufs + weights + interm + scratch


def _uncertainty_reg_kernel(x_ref, u_ref, w12_ref, w3_ref, b3_ref, o_ref,
                            sum_ref, ssq_ref, *,
                            rc, hw_true, uncertain, compute_dtype):
    p = pl.program_id(1)          # phase: 0 = stats, 1 = normalize + output
    t = pl.program_id(2)          # HW tile index
    tile = x_ref.shape[-1]

    # In-kernel cast (rides in VALU slack; avoids a wrapper-side HBM copy).
    x = x_ref[...].astype(compute_dtype)                       # (C, tile)

    # Fused cur_point_conv + ltrb_conv as one MXU matmul.  Rows [0, 4rc) =
    # ltrb_conv, rows [4rc, 5rc) = cur_point_conv.  Conv biases are omitted:
    # a per-channel constant before affine-free InstanceNorm cancels exactly.
    z = jnp.dot(w12_ref[...], x, preferred_element_type=jnp.float32)  # (5rc, tile) f32

    @pl.when(jnp.logical_and(p == 0, t == 0))
    def _():
        sum_ref[...] = jnp.zeros_like(sum_ref)
        ssq_ref[...] = jnp.zeros_like(ssq_ref)

    @pl.when(p == 0)
    def _():
        # Phase 0: single-pass stats accumulation over the HW tiles.
        sum_ref[...] += jnp.sum(z, axis=1, keepdims=True)
        ssq_ref[...] += jnp.sum(z * z, axis=1, keepdims=True)

    @pl.when(p == 1)
    def _():
        # Phase 1: InstanceNorm(affine=False) + ReLU with the accumulated
        # stats (divide by the TRUE HW so zero-padded lanes are exact).
        inv_hw = jnp.float32(1.0 / hw_true)
        mean = sum_ref[...] * inv_hw                           # (5rc, 1)
        var = jnp.maximum(ssq_ref[...] * inv_hw - mean * mean, 0.0)
        scale = lax.rsqrt(var + EPS)
        y = jnp.maximum((z - mean) * scale, 0.0)               # (5rc, tile) f32

        # Uncertainty scaling: groups 0..3 (l/t/r/b, rc channels each) are
        # multiplied by one uncertainty channel; group 4 (fm_short) by 1.
        uf = u_ref[...].astype(jnp.float32)                    # (4, tile)
        if not uncertain:
            uf = 1.0 - uf
        mult = jnp.concatenate(
            [uf, jnp.ones((1, tile), jnp.float32)], axis=0)    # (5, tile)
        y5 = (y.reshape(5, rc, tile) * mult[:, None, :]).reshape(5 * rc, tile)

        # Merged uncertainty_conv: single (C, 5rc) @ (5rc, tile) matmul.
        out = jnp.dot(w3_ref[...], y5.astype(compute_dtype),
                      preferred_element_type=jnp.float32)      # (C, tile)
        out = out + b3_ref[...]
        o_ref[...] = jnp.maximum(out, 0.0).astype(o_ref.dtype)


def uncertainty_reg_branch(feature_nchw, uncertainties_nchw, params, *,
                           refeat_channels, uncertain=True,
                           compute_dtype=jnp.bfloat16, out_dtype=None,
                           max_tile_hw=None):
    """feature: (N, Cin, H, W); uncertainties: (N, 4, H, W) -> (N, Cin, H, W).

    Params use the PyTorch Conv2d(kernel_size=1) layout (1x1 squeezed):
      w1 (rc, C), b1 (rc,), w2 (4rc, C), b2 (4rc,), w3 (C, 5rc), b3 (C,).
    b1/b2 are accepted but unused (they cancel in the affine-free InstanceNorm).
    """
    N, C, H, W = feature_nchw.shape
    assert uncertainties_nchw.shape == (N, 4, H, W)
    rc = refeat_channels
    if rc % 8 != 0:
        raise ValueError("refeat_channels must be a multiple of 8 (f32 sublane "
                         "tile) so the grouped uncertainty scaling is layout-free")
    HW = H * W
    w1, b1, w2, b2, w3, b3 = params
    out_dtype = feature_nchw.dtype if out_dtype is None else out_dtype

    in_b = jnp.dtype(feature_nchw.dtype).itemsize
    out_b = jnp.dtype(out_dtype).itemsize
    cb = jnp.dtype(compute_dtype).itemsize

    # --- HW tiling: lane dim is always a multiple of 128; tile sized per-gen.
    vmem_cap = _vmem_capacity_bytes()
    budget = int(vmem_cap * 0.35)           # per-step working-set target

    def est(tile):
        return _per_step_vmem_bytes(tile, C, rc, in_b, out_b, cb)

    hw128 = _round_up(HW, 128)
    candidates = [hw128] + [t for t in (4096, 2048, 1024, 512, 256, 128)
                            if t < hw128]
    tile = candidates[-1]
    for cand in candidates:
        if est(cand) <= budget:
            tile = cand
            break
    if max_tile_hw is not None:
        tile = min(tile, max(128, _round_up(max_tile_hw, 128)))
    hw_pad = _round_up(HW, tile)
    n_tiles = hw_pad // tile

    # Free reshapes of NCHW (no transposes, no dtype casts in the wrapper).
    x = feature_nchw.reshape(N, C, HW)
    u = uncertainties_nchw.reshape(N, 4, HW)
    if hw_pad != HW:
        pad = hw_pad - HW
        x = jnp.pad(x, ((0, 0), (0, 0), (0, pad)))
        u = jnp.pad(u, ((0, 0), (0, 0), (0, pad)))

    # Fused input-conv weight; unsplit output-conv weight.
    w12 = jnp.concatenate([w2, w1], axis=0).astype(compute_dtype)   # (5rc, C)
    w3c = jnp.asarray(w3).astype(compute_dtype)                     # (C, 5rc)
    b3c = jnp.asarray(b3)[:, None].astype(jnp.float32)              # (C, 1)

    kernel = functools.partial(_uncertainty_reg_kernel, rc=rc, hw_true=HW,
                               uncertain=uncertain, compute_dtype=compute_dtype)

    # Always set the scoped VMEM limit explicitly (v5e default is 16 MiB);
    # cap at ~75% of physical so v7x (64 MiB) is respected.
    vmem_limit = int(min(vmem_cap * 3 // 4, max(2 * est(tile), 32 * 2**20)))

    out = pl.pallas_call(
        kernel,
        out_shape=jax.ShapeDtypeStruct((N, C, hw_pad), out_dtype),
        grid_spec=pltpu.PrefetchScalarGridSpec(
            num_scalar_prefetch=0,
            grid=(N, 2, n_tiles),   # (sample, phase, HW tile)
            in_specs=[
                # x is streamed in both phases (resident when n_tiles == 1).
                pl.BlockSpec((pl.Squeezed(), C, tile), lambda n, p, t: (n, 0, t)),
                # uncertainties only needed in phase 1 (t*p pins tile 0 in phase 0).
                pl.BlockSpec((pl.Squeezed(), 4, tile), lambda n, p, t: (n, 0, t * p)),
                pl.BlockSpec((5 * rc, C), lambda n, p, t: (0, 0)),
                pl.BlockSpec((C, 5 * rc), lambda n, p, t: (0, 0)),
                pl.BlockSpec((C, 1), lambda n, p, t: (0, 0)),
            ],
            # t*p keeps the output block resident (and unwritten-back) during
            # phase 0, so each output tile is DMA'd to HBM exactly once.
            out_specs=pl.BlockSpec((pl.Squeezed(), C, tile),
                                   lambda n, p, t: (n, 0, t * p)),
            scratch_shapes=[pltpu.VMEM((5 * rc, 1), jnp.float32),   # sum
                            pltpu.VMEM((5 * rc, 1), jnp.float32)],  # sum of squares
        ),
        compiler_params=pltpu.CompilerParams(
            dimension_semantics=("parallel", "arbitrary", "arbitrary"),
            vmem_limit_bytes=vmem_limit),
    )(x, u, w12, w3c, b3c)

    if hw_pad != HW:
        out = out[:, :, :HW]
    return out.reshape(N, C, H, W)


def _reference_jax(feature, uncertainties, params, *, refeat_channels,
                   uncertain=True):
    """Pure-JAX f32 reference mirroring the PyTorch forward (NCHW)."""
    w1, b1, w2, b2, w3, b3 = params
    rc = refeat_channels

    def conv1x1(x, w, b):  # w: (Cout, Cin), b: (Cout,)
        return jnp.einsum('nchw,dc->ndhw', x, w) + b[None, :, None, None]

    def instnorm_relu(x):
        mean = jnp.mean(x, axis=(2, 3), keepdims=True)
        var = jnp.mean((x - mean) ** 2, axis=(2, 3), keepdims=True)
        return jnp.maximum((x - mean) * lax.rsqrt(var + EPS), 0.0)

    fm_short = instnorm_relu(conv1x1(feature, w1, b1))
    ltrb = instnorm_relu(conv1x1(feature, w2, b2))
    u = uncertainties if uncertain else 1.0 - uncertainties
    parts = [ltrb[:, g * rc:(g + 1) * rc] * u[:, g:g + 1] for g in range(4)]
    cat = jnp.concatenate(parts + [fm_short], axis=1)
    return jnp.maximum(conv1x1(cat, w3, b3), 0.0)


def _init_params(key, in_channels, refeat_channels):
    rc = refeat_channels
    ks = jax.random.split(key, 6)
    w1 = jax.random.normal(ks[0], (rc, in_channels), jnp.float32) * 0.1
    b1 = jax.random.normal(ks[1], (rc,), jnp.float32) * 0.1
    w2 = jax.random.normal(ks[2], (4 * rc, in_channels), jnp.float32) * 0.1
    b2 = jax.random.normal(ks[3], (4 * rc,), jnp.float32) * 0.1
    w3 = jax.random.normal(ks[4], (in_channels, 5 * rc), jnp.float32) * 0.1
    b3 = jax.random.normal(ks[5], (in_channels,), jnp.float32) * 0.1
    return (w1, b1, w2, b2, w3, b3)


if __name__ == "__main__":
    key = jax.random.PRNGKey(0)

    # --- case 1: aligned HW (single tile), f32 + bf16 paths ------------------
    N, C, H, W = 2, 32, 16, 16       # HW = 256 (lane-dense, single tile)
    rc = 8
    k_feat, k_unc, k_par, k2 = jax.random.split(key, 4)
    feature = jax.random.normal(k_feat, (N, C, H, W), jnp.float32)
    uncertainties = jax.random.uniform(k_unc, (N, 4, H, W), jnp.float32)
    params = _init_params(k_par, C, rc)

    ref = _reference_jax(feature, uncertainties, params,
                         refeat_channels=rc, uncertain=True)

    out_f32 = uncertainty_reg_branch(feature, uncertainties, params,
                                     refeat_channels=rc, uncertain=True,
                                     compute_dtype=jnp.float32)
    out_f32 = jax.block_until_ready(out_f32)
    assert out_f32.shape == (N, C, H, W)
    assert jnp.allclose(out_f32, ref, atol=2e-3, rtol=2e-3), "f32 mismatch"

    out_bf16 = uncertainty_reg_branch(feature, uncertainties, params,
                                      refeat_channels=rc, uncertain=True)
    out_bf16 = jax.block_until_ready(out_bf16)
    assert out_bf16.shape == (N, C, H, W)
    assert jnp.allclose(out_bf16, ref, atol=1e-1, rtol=5e-2), "bf16 mismatch"

    # --- case 2: force multiple HW tiles (exercises two-phase InstanceNorm) --
    out_tiled = uncertainty_reg_branch(feature, uncertainties, params,
                                       refeat_channels=rc, uncertain=True,
                                       compute_dtype=jnp.float32,
                                       max_tile_hw=128)      # 2 tiles of 128
    out_tiled = jax.block_until_ready(out_tiled)
    assert jnp.allclose(out_tiled, ref, atol=2e-3, rtol=2e-3), "tiled mismatch"

    # --- case 3: non-128-aligned HW (padded lanes) + uncertain=False + N=1 ---
    N2, C2, H2, W2 = 1, 16, 10, 10    # HW = 100 -> padded to 128 lanes
    kf2, ku2, kp2 = jax.random.split(k2, 3)
    feat2 = jax.random.normal(kf2, (N2, C2, H2, W2), jnp.float32)
    unc2 = jax.random.uniform(ku2, (N2, 4, H2, W2), jnp.float32)
    params2 = _init_params(kp2, C2, rc)
    ref2 = _reference_jax(feat2, unc2, params2, refeat_channels=rc,
                          uncertain=False)
    out2 = uncertainty_reg_branch(feat2, unc2, params2, refeat_channels=rc,
                                  uncertain=False, compute_dtype=jnp.float32)
    out2 = jax.block_until_ready(out2)
    assert out2.shape == (N2, C2, H2, W2)
    assert jnp.allclose(out2, ref2, atol=2e-3, rtol=2e-3), "padded mismatch"

    print("KERNEL_OK")
</pallas_src>

<mosaic_0001>
module attributes {stable_mosaic.version = 11 : i64} {
  func.func @_uncertainty_reg_kernel(%arg0: i32, %arg1: i32, %arg2: i32, %arg3: memref<1x32x256xf32, #tpu.memory_space<vmem>>, %arg4: memref<1x4x256xf32, #tpu.memory_space<vmem>>, %arg5: memref<40x32xf32, #tpu.memory_space<vmem>>, %arg6: memref<32x40xf32, #tpu.memory_space<vmem>>, %arg7: memref<32x1xf32, #tpu.memory_space<vmem>>, %arg8: memref<1x32x256xf32, #tpu.memory_space<vmem>>, %arg9: memref<40x1xf32, #tpu.memory_space<vmem>>, %arg10: memref<40x1xf32, #tpu.memory_space<vmem>>) attributes {dimension_semantics = [#tpu.dimension_semantics<parallel>, #tpu.dimension_semantics<arbitrary>, #tpu.dimension_semantics<arbitrary>], iteration_bounds = array<i64: 2, 2, 1>, scalar_prefetch = 0 : i64, scratch_operands = 2 : i64, tpu.core_type = #tpu.core_type<tc>, window_params = [{transform_indices = @transform_0, window_bounds = array<i64: 1, 32, 256>}, {transform_indices = @transform_1, window_bounds = array<i64: 1, 4, 256>}, {pipeline_mode = #tpu.pipeline_mode<synchronous>, transform_indices = @transform_2, window_bounds = array<i64: 40, 32>}, {pipeline_mode = #tpu.pipeline_mode<synchronous>, transform_indices = @transform_3, window_bounds = array<i64: 32, 40>}, {pipeline_mode = #tpu.pipeline_mode<synchronous>, transform_indices = @transform_4, window_bounds = array<i64: 32, 1>}, {transform_indices = @transform_5, window_bounds = array<i64: 1, 32, 256>}]} {
    %c0 = arith.constant 0 : index
    %c0_0 = arith.constant 0 : index
    %c0_1 = arith.constant 0 : index
    %0 = vector.load %arg3[%c0, %c0_0, %c0_1] : memref<1x32x256xf32, #tpu.memory_space<vmem>>, vector<1x32x256xf32>
    %1 = vector.shape_cast %0 : vector<1x32x256xf32> to vector<32x256xf32>
    %c0_2 = arith.constant 0 : index
    %c0_3 = arith.constant 0 : index
    %2 = vector.load %arg5[%c0_2, %c0_3] : memref<40x32xf32, #tpu.memory_space<vmem>>, vector<40x32xf32>
    %cst = arith.constant dense<0.000000e+00> : vector<40x256xf32>
    %3 = tpu.matmul %2, %1, %cst {dimension_numbers = #tpu.dot_dimension_numbers<[1], [0], [0], [1], [0, 0, 1, 1], [], []>} : vector<40x32xf32>, vector<32x256xf32>, vector<40x256xf32> -> vector<40x256xf32>
    %c0_i32 = arith.constant 0 : i32
    %4 = arith.cmpi eq, %arg1, %c0_i32 : i32
    %c0_i32_4 = arith.constant 0 : i32
    %5 = arith.cmpi eq, %arg2, %c0_i32_4 : i32
    %6 = arith.andi %4, %5 : i1
    %7 = arith.extui %6 : i1 to i32
    %c0_i32_5 = arith.constant 0 : i32
    %8 = arith.cmpi ne, %7, %c0_i32_5 : i32
    scf.if %8 {
      %cst_9 = arith.constant 0.000000e+00 : f32
      %15 = vector.broadcast %cst_9 : f32 to vector<40x1xf32>
      %c0_10 = arith.constant 0 : index
      %c0_11 = arith.constant 0 : index
      %16 = vector.load %arg9[%c0_10, %c0_11] : memref<40x1xf32, #tpu.memory_space<vmem>>, vector<40x1xf32>
      tpu.vector_store %arg9[%c0_10, %c0_11], %15 {strides = array<i32>} : memref<40x1xf32, #tpu.memory_space<vmem>>, vector<40x1xf32>,
      %cst_12 = arith.constant 0.000000e+00 : f32
      %17 = vector.broadcast %cst_12 : f32 to vector<40x1xf32>
      %c0_13 = arith.constant 0 : index
      %c0_14 = arith.constant 0 : index
      %18 = vector.load %arg10[%c0_13, %c0_14] : memref<40x1xf32, #tpu.memory_space<vmem>>, vector<40x1xf32>
      tpu.vector_store %arg10[%c0_13, %c0_14], %17 {strides = array<i32>} : memref<40x1xf32, #tpu.memory_space<vmem>>, vector<40x1xf32>,
    } else {
    }
    %c0_i32_6 = arith.constant 0 : i32
    %9 = arith.cmpi eq, %arg1, %c0_i32_6 : i32
    %10 = arith.extui %9 : i1 to i32
    %c0_i32_7 = arith.constant 0 : i32
    %11 = arith.cmpi ne, %10, %c0_i32_7 : i32
    scf.if %11 {
      %c0_9 = arith.constant 0 : index
      %c0_10 = arith.constant 0 : index
      %15 = vector.load %arg9[%c0_9, %c0_10] : memref<40x1xf32, #tpu.memory_space<vmem>>, vector<40x1xf32>
      %cst_11 = arith.constant dense<0.000000e+00> : vector<40xf32>
      %16 = vector.multi_reduction <add>, %3, %cst_11 [1] : vector<40x256xf32> to vector<40xf32>
      %17 = vector.shape_cast %16 : vector<40xf32> to vector<40x1xf32>
      %18 = arith.addf %15, %17 : vector<40x1xf32>
      %c0_12 = arith.constant 0 : index
      %c0_13 = arith.constant 0 : index
      %19 = vector.load %arg9[%c0_12, %c0_13] : memref<40x1xf32, #tpu.memory_space<vmem>>, vector<40x1xf32>
      tpu.vector_store %arg9[%c0_12, %c0_13], %18 {strides = array<i32>} : memref<40x1xf32, #tpu.memory_space<vmem>>, vector<40x1xf32>,
      %c0_14 = arith.constant 0 : index
      %c0_15 = arith.constant 0 : index
      %20 = vector.load %arg10[%c0_14, %c0_15] : memref<40x1xf32, #tpu.memory_space<vmem>>, vector<40x1xf32>
      %21 = arith.mulf %3, %3 : vector<40x256xf32>
      %cst_16 = arith.constant dense<0.000000e+00> : vector<40xf32>
      %22 = vector.multi_reduction <add>, %21, %cst_16 [1] : vector<40x256xf32> to vector<40xf32>
      %23 = vector.shape_cast %22 : vector<40xf32> to vector<40x1xf32>
      %24 = arith.addf %20, %23 : vector<40x1xf32>
      %c0_17 = arith.constant 0 : index
      %c0_18 = arith.constant 0 : index
      %25 = vector.load %arg10[%c0_17, %c0_18] : memref<40x1xf32, #tpu.memory_space<vmem>>, vector<40x1xf32>
      tpu.vector_store %arg10[%c0_17, %c0_18], %24 {strides = array<i32>} : memref<40x1xf32, #tpu.memory_space<vmem>>, vector<40x1xf32>,
    } else {
    }
    %c1_i32 = arith.constant 1 : i32
    %12 = arith.cmpi eq, %arg1, %c1_i32 : i32
    %13 = arith.extui %12 : i1 to i32
    %c0_i32_8 = arith.constant 0 : i32
    %14 = arith.cmpi ne, %13, %c0_i32_8 : i32
    scf.if %14 {
      %c0_9 = arith.constant 0 : index
      %c0_10 = arith.constant 0 : index
      %15 = vector.load %arg9[%c0_9, %c0_10] : memref<40x1xf32, #tpu.memory_space<vmem>>, vector<40x1xf32>
      %cst_11 = arith.constant 3.906250e-03 : f32
      %16 = vector.broadcast %cst_11 : f32 to vector<40x1xf32>
      %17 = arith.mulf %15, %16 : vector<40x1xf32>
      %c0_12 = arith.constant 0 : index
      %c0_13 = arith.constant 0 : index
      %18 = vector.load %arg10[%c0_12, %c0_13] : memref<40x1xf32, #tpu.memory_space<vmem>>, vector<40x1xf32>
      %cst_14 = arith.constant 3.906250e-03 : f32
      %19 = vector.broadcast %cst_14 : f32 to vector<40x1xf32>
      %20 = arith.mulf %18, %19 : vector<40x1xf32>
      %21 = arith.mulf %17, %17 : vector<40x1xf32>
      %22 = arith.subf %20, %21 : vector<40x1xf32>
      %cst_15 = arith.constant 0.000000e+00 : f32
      %23 = vector.broadcast %cst_15 : f32 to vector<40x1xf32>
      %24 = arith.maximumf %22, %23 : vector<40x1xf32>
      %cst_16 = arith.constant 9.99999974E-6 : f32
      %25 = vector.broadcast %cst_16 : f32 to vector<40x1xf32>
      %26 = arith.addf %24, %25 : vector<40x1xf32>
      %27 = math.rsqrt %26 : vector<40x1xf32>
      %28 = vector.broadcast %17 : vector<40x1xf32> to vector<40x256xf32>
      %29 = arith.subf %3, %28 : vector<40x256xf32>
      %30 = vector.broadcast %27 : vector<40x1xf32> to vector<40x256xf32>
      %31 = arith.mulf %29, %30 : vector<40x256xf32>
      %cst_17 = arith.constant 0.000000e+00 : f32
      %32 = vector.broadcast %cst_17 : f32 to vector<40x256xf32>
      %33 = arith.maximumf %31, %32 : vector<40x256xf32>
      %c0_18 = arith.constant 0 : index
      %c0_19 = arith.constant 0 : index
      %c0_20 = arith.constant 0 : index
      %34 = vector.load %arg4[%c0_18, %c0_19, %c0_20] : memref<1x4x256xf32, #tpu.memory_space<vmem>>, vector<1x4x256xf32>
      %35 = vector.shape_cast %34 : vector<1x4x256xf32> to vector<4x256xf32>
      %cst_21 = arith.constant 1.000000e+00 : f32
      %36 = vector.broadcast %cst_21 : f32 to vector<1x256xf32>
      %37 = tpu.concatenate %35, %36 in 0 : vector<4x256xf32>, vector<1x256xf32> -> vector<5x256xf32>
      %38 = vector.shape_cast %33 : vector<40x256xf32> to vector<5x8x256xf32>
      %39 = vector.shape_cast %37 : vector<5x256xf32> to vector<5x1x256xf32>
      %40 = vector.broadcast %39 : vector<5x1x256xf32> to vector<5x8x256xf32>
      %41 = arith.mulf %38, %40 : vector<5x8x256xf32>
      %42 = vector.shape_cast %41 : vector<5x8x256xf32> to vector<40x256xf32>
      %c0_22 = arith.constant 0 : index
      %c0_23 = arith.constant 0 : index
      %43 = vector.load %arg6[%c0_22, %c0_23] : memref<32x40xf32, #tpu.memory_space<vmem>>, vector<32x40xf32>
      %cst_24 = arith.constant dense<0.000000e+00> : vector<32x256xf32>
      %44 = tpu.matmul %43, %42, %cst_24 {dimension_numbers = #tpu.dot_dimension_numbers<[1], [0], [0], [1], [0, 0, 1, 1], [], []>} : vector<32x40xf32>, vector<40x256xf32>, vector<32x256xf32> -> vector<32x256xf32>
      %c0_25 = arith.constant 0 : index
      %c0_26 = arith.constant 0 : index
      %45 = vector.load %arg7[%c0_25, %c0_26] : memref<32x1xf32, #tpu.memory_space<vmem>>, vector<32x1xf32>
      %46 = vector.broadcast %45 : vector<32x1xf32> to vector<32x256xf32>
      %47 = arith.addf %44, %46 : vector<32x256xf32>
      %cst_27 = arith.constant 0.000000e+00 : f32
      %48 = vector.broadcast %cst_27 : f32 to vector<32x256xf32>
      %49 = arith.maximumf %47, %48 : vector<32x256xf32>
      %c0_28 = arith.constant 0 : index
      %c0_29 = arith.constant 0 : index
      %c0_30 = arith.constant 0 : index
      %50 = vector.load %arg8[%c0_28, %c0_29, %c0_30] : memref<1x32x256xf32, #tpu.memory_space<vmem>>, vector<1x32x256xf32>
      %51 = vector.shape_cast %50 : vector<1x32x256xf32> to vector<32x256xf32>
      %52 = vector.shape_cast %49 : vector<32x256xf32> to vector<1x32x256xf32>
      tpu.vector_store %arg8[%c0_28, %c0_29, %c0_30], %52 {strides = array<i32>} : memref<1x32x256xf32, #tpu.memory_space<vmem>>, vector<1x32x256xf32>,
    } else {
    }
    return
  }
  func.func @transform_0(%arg0: i32, %arg1: i32, %arg2: i32) -> (i32, i32, i32) {
    %c0_i32 = arith.constant 0 : i32
    %c0_i32_0 = arith.constant 0 : i32
    return %arg0, %c0_i32, %arg2 : i32, i32, i32
  }
  func.func @transform_1(%arg0: i32, %arg1: i32, %arg2: i32) -> (i32, i32, i32) {
    %0 = arith.muli %arg2, %arg1 : i32
    %c0_i32 = arith.constant 0 : i32
    %c0_i32_0 = arith.constant 0 : i32
    return %arg0, %c0_i32, %0 : i32, i32, i32
  }
  func.func @transform_2(%arg0: i32, %arg1: i32, %arg2: i32) -> (i32, i32) {
    %c0_i32 = arith.constant 0 : i32
    %c0_i32_0 = arith.constant 0 : i32
    %c0_i32_1 = arith.constant 0 : i32
    return %c0_i32, %c0_i32_0 : i32, i32
  }
  func.func @transform_3(%arg0: i32, %arg1: i32, %arg2: i32) -> (i32, i32) {
    %c0_i32 = arith.constant 0 : i32
    %c0_i32_0 = arith.constant 0 : i32
    %c0_i32_1 = arith.constant 0 : i32
    return %c0_i32, %c0_i32_0 : i32, i32
  }
  func.func @transform_4(%arg0: i32, %arg1: i32, %arg2: i32) -> (i32, i32) {
    %c0_i32 = arith.constant 0 : i32
    %c0_i32_0 = arith.constant 0 : i32
    %c0_i32_1 = arith.constant 0 : i32
    return %c0_i32, %c0_i32_0 : i32, i32
  }
  func.func @transform_5(%arg0: i32, %arg1: i32, %arg2: i32) -> (i32, i32, i32) {
    %0 = arith.muli %arg2, %arg1 : i32
    %c0_i32 = arith.constant 0 : i32
    %c0_i32_0 = arith.constant 0 : i32
    return %arg0, %c0_i32, %0 : i32, i32, i32
  }
}

</mosaic_0001>

<llo_original>
// kernel: tpu_custom_call.1
$region0: #{tpu_custom_call.1}
  #allocation0 [shape = 'u32[]', space=smem, size = 0x4, offset = 0x4, fixed_abs, tag = 'smem constant byte address 0x4 - core index']
  #allocation1 [shape = 'u32[144,128]{1,0:T(1,128)}', space=vmem, size = 0x12000, scoped, tag = 'internal scratch']
  #allocation2 [shape = 'f32[40,1]{1,0:T(8,128)}', space=vmem, size = 0x5000, scoped, tag = 'scratch operand']
  #allocation3 [shape = 'f32[40,1]{1,0:T(8,128)}', space=vmem, size = 0x5000, scoped, tag = 'scratch operand']
  %s0 = inlined_call_operand.hbm [shape: f32[2,32,256], index: 0, kind: input, shape index: {}]
  %s1 = inlined_call_operand.vmem [shape: f32[2,4,256], index: 1, kind: input, shape index: {}]
  %s2 = inlined_call_operand.vmem [shape: f32[40,32], index: 2, kind: input, shape index: {}]
  %s3 = inlined_call_operand.vmem [shape: f32[32,40], index: 3, kind: input, shape index: {}]
  %s4 = inlined_call_operand.vmem [shape: f32[32,1], index: 4, kind: input, shape index: {}]
  %s5 = inlined_call_operand.hbm [shape: f32[2,32,256], index: 5, kind: output, shape index: {}]
  %s6 = sld [smem:[#allocation0]]
  $region69: #{tpu_custom_call.1} parent=0
    _
  %s8 = ssub.s32 1, %s6
  %s9 = scalar_select 0, %s8, %s6
  $region1: #{tpu_custom_call.1} parent=0
    #allocation4 [shape = 'u8[65536]{0}', space=vmem, size = 0x10000, scoped, tag = 'input window, operand 0']
    #allocation5 [shape = 's32[2]{0}', space=sflag, size = 0x8, scoped, tag = 'scoped memory for tpu_custom_call.1']
    #allocation6 [shape = 's32[2]{0}', space=sflag, size = 0x8, scoped, tag = 'scoped memory for tpu_custom_call.1']
    #allocation7 [shape = 'u8[65536]{0}', space=vmem, size = 0x10000, scoped, tag = 'output window, operand 0']
    %10 = vsyncpa [#allocation5], 0
    %s11 = scalar_lea.sflag [#allocation5], 1
    %12 = vsyncpa %s11, 0
    %13 = vsyncpa [#allocation6], 0
    %s14 = scalar_lea.sflag [#allocation6], 1
    %15 = vsyncpa %s14, 0
    loop: start=0, step=1, limit=6
    $region2: #{tpu_custom_call.1} parent=1 // loop_pre_header
      _
    $region3: #{tpu_custom_call.1} parent=1 // loop_header
      %s17 = sphi 0, %s21
      %p18 = scmp.ge.s32.totalorder %s17, 6
      %s24 = sphi 0, %s43
      %s25 = sphi 0, %s39
      %s26 = sphi 0, %s35
      %s27 = sphi 0, %s24
      %s28 = sphi 0, %s25
      %s29 = sphi 0, %s26
      %s30 = sphi 0, %s27
      %s31 = sphi 0, %s28
      %s32 = sphi 0, %s29
      %s48 = sphi 0, %s50
      %s51 = sphi 0, %s48
      %s52 = sphi 0, %s51
      %s68 = sphi 0, %s52
      %s78 = sphi 0, %s80
      %s81 = sphi 0, %s78
      %s82 = sphi 0, %s81
      %s98 = sphi 0, %s82
      %s102 = sphi 0, %s102
      %s104 = sphi 0, %s102
      %s105 = sphi 0, %s104
      %s119 = sphi 0, %s105
      %s123 = sphi 0, %s123
      %s125 = sphi 0, %s123
      %s126 = sphi 0, %s125
      %s140 = sphi 0, %s126
      %s144 = sphi 0, %s144
      %s146 = sphi 0, %s144
      %s147 = sphi 0, %s146
      %s161 = sphi 0, %s147
      %s171 = sphi 0, %s173
      %s174 = sphi 0, %s171
      %s175 = sphi 0, %s174
      %s191 = sphi 0, %s175
    $region4: #{tpu_custom_call.1} parent=1 // loop_header_branch
      %20 = sbr.rel (%p18) target = $region8
    $region5: #{tpu_custom_call.1} parent=1 // loop_body
      %s22 = ssub.s32 %s17, 1
      %s23 = ssub.s32 %s17, 2
      %s33 = sadd.s32 1, %s26
      %p34 = scmp.ge.s32.totalorder %s33, 1
      %s35 = scalar_select %p34, 0, %s33
      %s36 = sadd.s32 1, %s25
      %s37 = scalar_select %p34, %s36, %s25
      %p38 = scmp.ge.s32.totalorder %s37, 2
      %s39 = scalar_select %p38, 0, %s37
      %s40 = sadd.s32 1, %s24
      %s41 = scalar_select %p38, %s40, %s24
      %p42 = scmp.ge.s32.totalorder %s41, 2
      %s43 = scalar_select %p42, 0, %s41
      %s44 = ssub.s32 %s24, %s43
      %s45 = ssub.s32 %s26, %s35
      %s46 = sor.u32 %s44, %s45
      %p47 = scmp.eq.s32.totalorder %s46, 0
      %s49 = sadd.s32 %s48, 1
      %s50 = scalar_select %p47, %s48, %s49
      %p53 = pneg %p47
      %p54 = scmp.eq.s32.totalorder %s17, 3
      %p55 = por %p53, %p54
      %p56 = scmp.ne.s32.totalorder %s48, %s51
      %p57 = scmp.eq.s32.totalorder %s17, 0
      %p58 = por %p56, %p57
      %p59 = scmp.ne.s32.totalorder %s48, %s51
      %p60 = scmp.eq.s32.totalorder %s22, 3
      %p61 = por %p59, %p60
      %p62 = scmp.ne.s32.totalorder %s51, %s52
      %p63 = scmp.eq.s32.totalorder %s22, 0
      %p64 = por %p62, %p63
      %p65 = scmp.ne.s32.totalorder %s51, %s52
      %p66 = scmp.eq.s32.totalorder %s23, 3
      %p67 = por %p65, %p66
      %p69 = scmp.ne.s32.totalorder %s52, %s68
      %p70 = scmp.eq.s32.totalorder %s23, 0
      %p71 = por %p69, %p70
      %s72 = smul.u32 %s26, %s25
      %s73 = smul.u32 %s35, %s39
      %s74 = ssub.s32 %s24, %s43
      %s75 = ssub.s32 %s72, %s73
      %s76 = sor.u32 %s74, %s75
      %p77 = scmp.eq.s32.totalorder %s76, 0
      %s79 = sadd.s32 %s78, 1
      %s80 = scalar_select %p77, %s78, %s79
      %p83 = pneg %p77
      %p84 = scmp.eq.s32.totalorder %s17, 3
      %p85 = por %p83, %p84
      %p86 = scmp.ne.s32.totalorder %s78, %s81
      %p87 = scmp.eq.s32.totalorder %s17, 0
      %p88 = por %p86, %p87
      %p89 = scmp.ne.s32.totalorder %s78, %s81
      %p90 = scmp.eq.s32.totalorder %s22, 3
      %p91 = por %p89, %p90
      %p92 = scmp.ne.s32.totalorder %s81, %s82
      %p93 = scmp.eq.s32.totalorder %s22, 0
      %p94 = por %p92, %p93
      %p95 = scmp.ne.s32.totalorder %s81, %s82
      %p96 = scmp.eq.s32.totalorder %s23, 3
      %p97 = por %p95, %p96
      %p99 = scmp.ne.s32.totalorder %s82, %s98
      %p100 = scmp.eq.s32.totalorder %s23, 0
      %p101 = por %p99, %p100
      %s103 = sadd.s32 %s102, 1
      %p106 = scmp.eq.s32.totalorder %s17, 3
      %p107 = scmp.ne.s32.totalorder %s102, %s104
      %p108 = scmp.eq.s32.totalorder %s17, 0
      %p109 = por %p107, %p108
      %p110 = scmp.ne.s32.totalorder %s102, %s104
      %p111 = scmp.eq.s32.totalorder %s22, 3
      %p112 = por %p110, %p111
      %p113 = scmp.ne.s32.totalorder %s104, %s105
      %p114 = scmp.eq.s32.totalorder %s22, 0
      %p115 = por %p113, %p114
      %p116 = scmp.ne.s32.totalorder %s104, %s105
      %p117 = scmp.eq.s32.totalorder %s23, 3
      %p118 = por %p116, %p117
      %p120 = scmp.ne.s32.totalorder %s105, %s119
      %p121 = scmp.eq.s32.totalorder %s23, 0
      %p122 = por %p120, %p121
      %s124 = sadd.s32 %s123, 1
      %p127 = scmp.eq.s32.totalorder %s17, 3
      %p128 = scmp.ne.s32.totalorder %s123, %s125
      %p129 = scmp.eq.s32.totalorder %s17, 0
      %p130 = por %p128, %p129
      %p131 = scmp.ne.s32.totalorder %s123, %s125
      %p132 = scmp.eq.s32.totalorder %s22, 3
      %p133 = por %p131, %p132
      %p134 = scmp.ne.s32.totalorder %s125, %s126
      %p135 = scmp.eq.s32.totalorder %s22, 0
      %p136 = por %p134, %p135
      %p137 = scmp.ne.s32.totalorder %s125, %s126
      %p138 = scmp.eq.s32.totalorder %s23, 3
      %p139 = por %p137, %p138
      %p141 = scmp.ne.s32.totalorder %s126, %s140
      %p142 = scmp.eq.s32.totalorder %s23, 0
      %p143 = por %p141, %p142
      %s145 = sadd.s32 %s144, 1
      %p148 = scmp.eq.s32.totalorder %s17, 3
      %p149 = scmp.ne.s32.totalorder %s144, %s146
      %p150 = scmp.eq.s32.totalorder %s17, 0
      %p151 = por %p149, %p150
      %p152 = scmp.ne.s32.totalorder %s144, %s146
      %p153 = scmp.eq.s32.totalorder %s22, 3
      %p154 = por %p152, %p153
      %p155 = scmp.ne.s32.totalorder %s146, %s147
      %p156 = scmp.eq.s32.totalorder %s22, 0
      %p157 = por %p155, %p156
      %p158 = scmp.ne.s32.totalorder %s146, %s147
      %p159 = scmp.eq.s32.totalorder %s23, 3
      %p160 = por %p158, %p159
      %p162 = scmp.ne.s32.totalorder %s147, %s161
      %p163 = scmp.eq.s32.totalorder %s23, 0
      %p164 = por %p162, %p163
      %s165 = smul.u32 %s26, %s25
      %s166 = smul.u32 %s35, %s39
      %s167 = ssub.s32 %s24, %s43
      %s168 = ssub.s32 %s165, %s166
      %s169 = sor.u32 %s167, %s168
      %p170 = scmp.eq.s32.totalorder %s169, 0
      %s172 = sadd.s32 %s171, 1
      %s173 = scalar_select %p170, %s171, %s172
      %p176 = pneg %p170
      %p177 = scmp.eq.s32.totalorder %s17, 3
      %p178 = por %p176, %p177
      %p179 = scmp.ne.s32.totalorder %s171, %s174
      %p180 = scmp.eq.s32.totalorder %s17, 0
      %p181 = por %p179, %p180
      %p182 = scmp.ne.s32.totalorder %s171, %s174
      %p183 = scmp.eq.s32.totalorder %s22, 3
      %p184 = por %p182, %p183
      %p185 = scmp.ne.s32.totalorder %s174, %s175
      %p186 = scmp.eq.s32.totalorder %s22, 0
      %p187 = por %p185, %p186
      %p188 = scmp.ne.s32.totalorder %s174, %s175
      %p189 = scmp.eq.s32.totalorder %s23, 3
      %p190 = por %p188, %p189
      %p192 = scmp.ne.s32.totalorder %s175, %s191
      %p193 = scmp.eq.s32.totalorder %s23, 0
      %p194 = por %p192, %p193
      %p195 = scmp.le.s32.totalorder 1, %s17
      %p196 = scmp.lt.s32.totalorder %s17, 5
      %p197 = pnand %p195, %p196
      %p198 = pneg %p197
      // Predicated region
      $region9: #{tpu_custom_call.1} parent=5 // pred_check
        _
      $region10: #{tpu_custom_call.1} parent=5 // pred_check_branch
        %200 = sbr.rel (%p197) target = $region12
      $region11: #{tpu_custom_call.1} parent=5 // pred_region
        %s201 = ssub.s32 %s17, 1
        // Predicated region
        $region13: #{tpu_custom_call.1} parent=11 // pred_check
          %p202 = pneg %p115
        $region14: #{tpu_custom_call.1} parent=11 // pred_check_branch
          %204 = sbr.rel (%p202) target = $region16
        $region15: #{tpu_custom_call.1} parent=11 // pred_region
          _
        $region16: #{tpu_custom_call.1} parent=11 // pred_fallthru
          _
        // Predicated region
        $region17: #{tpu_custom_call.1} parent=11 // pred_check
          %p205 = pneg %p136
        $region18: #{tpu_custom_call.1} parent=11 // pred_check_branch
          %207 = sbr.rel (%p205) target = $region20
        $region19: #{tpu_custom_call.1} parent=11 // pred_region
          _
        $region20: #{tpu_custom_call.1} parent=11 // pred_fallthru
          _
        // Predicated region
        $region21: #{tpu_custom_call.1} parent=11 // pred_check
          %p208 = pneg %p157
        $region22: #{tpu_custom_call.1} parent=11 // pred_check_branch
          %210 = sbr.rel (%p208) target = $region24
        $region23: #{tpu_custom_call.1} parent=11 // pred_region
          _
        $region24: #{tpu_custom_call.1} parent=11 // pred_fallthru
          _
      $region12: #{tpu_custom_call.1} parent=5 // pred_fallthru
        _
      %p211 = scmp.lt.s32.totalorder %s17, 4
      // Predicated region
      $region25: #{tpu_custom_call.1} parent=5 // pred_check
        %p212 = pneg %p211
      $region26: #{tpu_custom_call.1} parent=5 // pred_check_branch
        %214 = sbr.rel (%p212) target = $region28
      $region27: #{tpu_custom_call.1} parent=5 // pred_region
        // Predicated region
        $region29: #{tpu_custom_call.1} parent=27 // pred_check
          %p215 = pneg %p58
        $region30: #{tpu_custom_call.1} parent=27 // pred_check_branch
          %217 = sbr.rel (%p215) target = $region32
        $region31: #{tpu_custom_call.1} parent=27 // pred_region
          %s218 = sand.u32 %s48, 1
          %s219 = scalar_lea.sflag [#allocation5], %s218
          %s220 = sand.u32 %s48, 1
          %s221 = smul.addr %s220, 64
          %s222 = scalar_lea.vmem [#allocation4], %s221
          %s223 = smul.u32 2, %s26
          %s225 = ssub.s32 1024, 1024
          %226 = vsyncadd %s219, %s225
          %s227 = smul.addr %s24, 8
          %s228 = sadd.s32 %s223, %s227
          %s229 = smul.addr %s228, 128
          %s230 = scalar_lea.hbm %s0, %s229
          %s231 = sshll.u32 %s222, 4
          %s232 = int_to_ptr.vmem [resolvable:$true] %s231
          %237 = dma.hbm_to_vmem [thread:$0]  %s230, 1024, %s232, %s219, 256, 256, 16
        $region32: #{tpu_custom_call.1} parent=27 // pred_fallthru
          _
        // Predicated region
        $region33: #{tpu_custom_call.1} parent=27 // pred_check
          %p238 = pneg %p88
        $region34: #{tpu_custom_call.1} parent=27 // pred_check_branch
          %240 = sbr.rel (%p238) target = $region36
        $region35: #{tpu_custom_call.1} parent=27 // pred_region
          %s241 = smul.u32 %s26, %s25
          %s242 = smul.u32 2, %s241
          %p243 = scmp.lt.s32.totalorder %s24, 1
          %s244 = scalar_select %p243, %s24, 1
          %p245 = scmp.lt.s32.totalorder %s242, 1
          %s246 = scalar_select %p245, %s242, 1
          %s247 = smul.addr %s244, 2
          %s248 = sadd.s32 %s246, %s247
          %s249 = smul.addr %s248, 4
          %s250 = scalar_lea.vmem %s1, %s249
          %s251 = smul.u32 %s26, %s25
          %s252 = smul.u32 2, %s251
        $region36: #{tpu_custom_call.1} parent=27 // pred_fallthru
          _
      $region28: #{tpu_custom_call.1} parent=5 // pred_fallthru
        _
      %p253 = scmp.le.s32.totalorder 1, %s17
      %p254 = scmp.lt.s32.totalorder %s17, 5
      %p255 = pnand %p253, %p254
      %p256 = pneg %p255
      // Predicated region
      $region37: #{tpu_custom_call.1} parent=5 // pred_check
        _
      $region38: #{tpu_custom_call.1} parent=5 // pred_check_branch
        %258 = sbr.rel (%p255) target = $region40
      $region39: #{tpu_custom_call.1} parent=5 // pred_region
        %s259 = ssub.s32 %s17, 1
        %s260 = sand.u32 %s51, 1
        %s261 = scalar_lea.sflag [#allocation5], %s260
        %s262 = sand.u32 %s51, 1
        %s263 = smul.addr %s262, 64
        %s264 = scalar_lea.vmem [#allocation4], %s263
        // Predicated region
        $region41: #{tpu_custom_call.1} parent=39 // pred_check
          %p265 = pneg %p64
        $region42: #{tpu_custom_call.1} parent=39 // pred_check_branch
          %267 = sbr.rel (%p265) target = $region44
        $region43: #{tpu_custom_call.1} parent=39 // pred_region
          %268 = dma.done %s261, 1024
        $region44: #{tpu_custom_call.1} parent=39 // pred_fallthru
          _
        %s269 = sand.u32 %s51, 1
        %s270 = scalar_lea.sflag [#allocation5], %s269
        %s271 = sand.u32 %s51, 1
        %s272 = smul.addr %s271, 64
        %s273 = scalar_lea.vmem [#allocation4], %s272
        %p274 = pneg %p64
        %p275 = pneg %p61
        %s276 = smul.u32 %s29, %s28
        %s277 = smul.u32 2, %s276
        %p278 = scmp.lt.s32.totalorder %s27, 1
        %s279 = scalar_select %p278, %s27, 1
        %p280 = scmp.lt.s32.totalorder %s277, 1
        %s281 = scalar_select %p280, %s277, 1
        %s282 = smul.addr %s279, 2
        %s283 = sadd.s32 %s281, %s282
        %s284 = smul.addr %s283, 4
        %s285 = scalar_lea.vmem %s1, %s284
        %p286 = pneg %p94
        %p287 = pneg %p91
        %p288 = pneg %p115
        %p289 = pneg %p112
        %p290 = pneg %p136
        %p291 = pneg %p133
        %p292 = pneg %p157
        %p293 = pneg %p154
        %p294 = pneg %p187
        %p295 = pneg %p184
        %s296 = sand.u32 %s174, 1
        %s297 = scalar_lea.sflag [#allocation6], %s296
        %s298 = sand.u32 %s174, 1
        %s299 = smul.addr %s298, 64
        %s300 = scalar_lea.vmem [#allocation7], %s299
        %s301 = smul.u32 2, %s29
        %s302 = smul.u32 %s29, %s28
        %s303 = smul.u32 2, %s302
        %p304 = scmp.lt.s32.totalorder %s27, 1
        %s305 = scalar_select %p304, %s27, 1
        %p306 = scmp.lt.s32.totalorder %s303, 1
        %s307 = scalar_select %p306, %s303, 1
        %s308 = smul.addr %s305, 2
        %s309 = sadd.s32 %s307, %s308
        %s310 = smul.addr %s309, 4
        %s311 = scalar_lea.vmem %s1, %s310
        %s312 = smul.u32 %s29, %s28
        %s313 = smul.u32 2, %s312
        %s314 = smul.u32 %s29, %s28
        %s315 = smul.u32 2, %s314
        %v316 = vld [vmem:[%s264] sm:$0xff]
        %v317 = vld [vmem:[%s264 + $0x8] sm:$0xff]
        %v318 = vld [vmem:[%s264 + $0x10] sm:$0xff]
        %v319 = vld [vmem:[%s264 + $0x18] sm:$0xff]
        %v320 = vld [vmem:[%s264 + $0x20] sm:$0xff]
        %v321 = vld [vmem:[%s264 + $0x28] sm:$0xff]
        %v322 = vld [vmem:[%s264 + $0x30] sm:$0xff]
        %v323 = vld [vmem:[%s264 + $0x38] sm:$0xff]
        %v324 = vld [vmem:[%s2] sm:$0xff]
        %v325 = vld [vmem:[%s2 + $0x8] sm:$0xff]
        %v326 = vld [vmem:[%s2 + $0x10] sm:$0xff]
        %v327 = vld [vmem:[%s2 + $0x18] sm:$0xff]
        %v328 = vld [vmem:[%s2 + $0x20] sm:$0xff]
        %vm329 = vcmask 261120
        %v331 = vsel %vm329, %v324, 0
        %v334 = vsel %vm329, %v325, 0
        %v337 = vsel %vm329, %v326, 0
        %v340 = vsel %vm329, %v327, 0
        %v343 = vsel %vm329, %v328, 0
        %345 = vmatprep.subr.mxu0 %v317
        %346 = vmatpush1.msra.mxu0 %v316
        %347 = vmatprep.subr.mxu0 %v319
        %348 = vmatpush1.msra.mxu0 %v318
        %349 = vmatprep.subr.mxu0 %v321
        %350 = vmatpush1.msra.mxu0 %v320
        %351 = vmatprep.subr.mxu0 %v323
        %352 = vmatpush1.msra.mxu0 %v322
        %353 = vmatprep.subr.mxu0 0.0
        %354 = vmatpush1.msra.mxu0 0.0
        %355 = vmatprep.subr.mxu0 0.0
        %356 = vmatpush1.msra.mxu0 0.0
        %357 = vmatprep.subr.mxu0 0.0
        %358 = vmatpush1.msra.mxu0 0.0
        %359 = vmatprep.subr.mxu0 0.0
        %360 = vmatpush1.msra.mxu0 0.0
        %361 = vmatprep.subr.mxu0 0.0
        %362 = vmatpush1.msra.mxu0 0.0
        %363 = vmatprep.subr.mxu0 0.0
        %364 = vmatpush1.msra.mxu0 0.0
        %365 = vmatprep.subr.mxu0 0.0
        %366 = vmatpush1.msra.mxu0 0.0
        %367 = vmatprep.subr.mxu0 0.0
        %368 = vmatpush1.msra.mxu0 0.0
        %369 = vmatprep.subr.mxu0 0.0
        %370 = vmatpush1.msra.mxu0 0.0
        %371 = vmatprep.subr.mxu0 0.0
        %372 = vmatpush1.msra.mxu0 0.0
        %373 = vmatprep.subr.mxu0 0.0
        %374 = vmatpush1.msra.mxu0 0.0
        %375 = vmatprep.subr.mxu0 0.0
        %376 = vmatpush1.msra.mxu0 0.0
        %377 = vmatprep.subr.mxu0 0.0
        %378 = vmatpush1.msra.mxu0 0.0
        %379 = vmatprep.subr.mxu0 0.0
        %380 = vmatpush1.msra.mxu0 0.0
        %381 = vmatprep.subr.mxu0 0.0
        %382 = vmatpush1.msra.mxu0 0.0
        %383 = vmatprep.subr.mxu0 0.0
        %384 = vmatpush1.msra.mxu0 0.0
        %385 = vmatprep.subr.mxu0 0.0
        %386 = vmatpush1.msra.mxu0 0.0
        %387 = vmatprep.subr.mxu0 0.0
        %388 = vmatpush1.msra.mxu0 0.0
        %389 = vmatprep.subr.mxu0 0.0
        %390 = vmatpush1.msra.mxu0 0.0
        %391 = vmatprep.subr.mxu0 0.0
        %392 = vmatpush1.msra.mxu0 0.0
        %393 = vmatprep.subr.mxu0 0.0
        %394 = vmatpush1.msra.mxu0 0.0
        %395 = vmatprep.subr.mxu0 0.0
        %396 = vmatpush1.msra.mxu0 0.0
        %397 = vmatprep.subr.mxu0 0.0
        %398 = vmatpush1.msra.mxu0 0.0
        %399 = vmatprep.subr.mxu0 0.0
        %400 = vmatpush1.msra.mxu0 0.0
        %401 = vmatprep.subr.mxu0 0.0
        %402 = vmatpush1.msra.mxu0 0.0
        %403 = vmatprep.subr.mxu0 0.0
        %404 = vmatpush1.msra.mxu0 0.0
        %405 = vmatprep.subr.mxu0 0.0
        %406 = vmatpush1.msra.mxu0 0.0
        %407 = vmatprep.subr.mxu0 0.0
        %408 = vmatpush1.msra.mxu0 0.0
        %409 = vmatprep.mubr.f32.mxu0 0.0
        %410 = vmatmul.mubr.f32.gmra.mrb[0].mxu0 %v331
        %v411 = vpop.f32.mrb[0].mxu0
        %v412 = vadd.f32 0.0, %v411
        %v413 = vpop.f32.mrb[0].mxu0
        %v414 = vadd.f32 0.0, %v413
        %415 = vmatprep.mubr.f32.mxu0 0.0
        %416 = vmatmul.mubr.f32.gmra.mrb[0].mxu0 %v334
        %v417 = vpop.f32.mrb[0].mxu0
        %v418 = vadd.f32 0.0, %v417
        %v419 = vpop.f32.mrb[0].mxu0
        %v420 = vadd.f32 0.0, %v419
        %421 = vmatprep.mubr.f32.mxu0 0.0
        %422 = vmatmul.mubr.f32.gmra.mrb[0].mxu0 %v337
        %v423 = vpop.f32.mrb[0].mxu0
        %v424 = vadd.f32 0.0, %v423
        %v425 = vpop.f32.mrb[0].mxu0
        %v426 = vadd.f32 0.0, %v425
        %427 = vmatprep.mubr.f32.mxu0 0.0
        %428 = vmatmul.mubr.f32.gmra.mrb[0].mxu0 %v340
        %v429 = vpop.f32.mrb[0].mxu0
        %v430 = vadd.f32 0.0, %v429
        %v431 = vpop.f32.mrb[0].mxu0
        %v432 = vadd.f32 0.0, %v431
        %433 = vmatprep.mubr.f32.mxu0 0.0
        %434 = vmatmul.mubr.f32.gmra.mrb[0].mxu0 %v343
        %v435 = vpop.f32.mrb[0].mxu0
        %v436 = vadd.f32 0.0, %v435
        %v437 = vpop.f32.mrb[0].mxu0
        %v438 = vadd.f32 0.0, %v437
        %439 = vdwg.mxu0
        %p440 = scmp.eq.s32.totalorder %s28, 0
        %p441 = scmp.eq.s32.totalorder %s29, 0
        %p442 = pnand %p440, %p441
        %p443 = pneg %p442
        // Predicated region
        $region45: #{tpu_custom_call.1} parent=39 // pred_check
          _
        $region46: #{tpu_custom_call.1} parent=39 // pred_check_branch
          %445 = sbr.rel (%p442) target = $region48
        $region47: #{tpu_custom_call.1} parent=39 // pred_region
          %vm446 = vcmask 7168
          %447 = vst.msk [vmem:[#allocation2] sm:$0xff] %vm446, 0.0
          %448 = vst.msk [vmem:[#allocation2 + $0x8] sm:$0xff] %vm446, 0.0
          %449 = vst.msk [vmem:[#allocation2 + $0x10] sm:$0xff] %vm446, 0.0
          %450 = vst.msk [vmem:[#allocation2 + $0x18] sm:$0xff] %vm446, 0.0
          %451 = vst.msk [vmem:[#allocation2 + $0x20] sm:$0xff] %vm446, 0.0
          %452 = vst.msk [vmem:[#allocation3] sm:$0xff] %vm446, 0.0
          %453 = vst.msk [vmem:[#allocation3 + $0x8] sm:$0xff] %vm446, 0.0
          %454 = vst.msk [vmem:[#allocation3 + $0x10] sm:$0xff] %vm446, 0.0
          %455 = vst.msk [vmem:[#allocation3 + $0x18] sm:$0xff] %vm446, 0.0
          %456 = vst.msk [vmem:[#allocation3 + $0x20] sm:$0xff] %vm446, 0.0
        $region48: #{tpu_custom_call.1} parent=39 // pred_fallthru
          _
        // Predicated region
        $region49: #{tpu_custom_call.1} parent=39 // pred_check
          %p457 = pneg %p440
        $region50: #{tpu_custom_call.1} parent=39 // pred_check_branch
          %459 = sbr.rel (%p457) target = $region52
        $region51: #{tpu_custom_call.1} parent=39 // pred_region
          %v460 = vld [vmem:[#allocation2] sm:$0xff]
          %v461 = vld [vmem:[#allocation2 + $0x8] sm:$0xff]
          %v462 = vld [vmem:[#allocation2 + $0x10] sm:$0xff]
          %v463 = vld [vmem:[#allocation2 + $0x18] sm:$0xff]
          %v464 = vld [vmem:[#allocation2 + $0x20] sm:$0xff]
          %v465 = vadd.f32 %v412, %v414
          %466 = vadd.xlane.f32.xlu0 %v465
          %v467 = vpop.xlane.xlu0 %466
          %v468 = vadd.f32 %v418, %v420
          %469 = vadd.xlane.f32.xlu0 %v468
          %v470 = vpop.xlane.xlu0 %469
          %v471 = vadd.f32 %v424, %v426
          %472 = vadd.xlane.f32.xlu0 %v471
          %v473 = vpop.xlane.xlu0 %472
          %v474 = vadd.f32 %v430, %v432
          %475 = vadd.xlane.f32.xlu0 %v474
          %v476 = vpop.xlane.xlu0 %475
          %v477 = vadd.f32 %v436, %v438
          %478 = vadd.xlane.f32.xlu0 %v477
          %v479 = vpop.xlane.xlu0 %478
          %v480 = vadd.f32 %v460, %v467
          %v481 = vadd.f32 %v461, %v470
          %v482 = vadd.f32 %v462, %v473
          %v483 = vadd.f32 %v463, %v476
          %v484 = vadd.f32 %v464, %v479
          %vm485 = vcmask 7168
          %486 = vst.msk [vmem:[#allocation2] sm:$0xff] %vm485, %v480
          %487 = vst.msk [vmem:[#allocation2 + $0x8] sm:$0xff] %vm485, %v481
          %488 = vst.msk [vmem:[#allocation2 + $0x10] sm:$0xff] %vm485, %v482
          %489 = vst.msk [vmem:[#allocation2 + $0x18] sm:$0xff] %vm485, %v483
          %490 = vst.msk [vmem:[#allocation2 + $0x20] sm:$0xff] %vm485, %v484
          %v491 = vld [vmem:[#allocation3] sm:$0xff]
          %v492 = vld [vmem:[#allocation3 + $0x8] sm:$0xff]
          %v493 = vld [vmem:[#allocation3 + $0x10] sm:$0xff]
          %v494 = vld [vmem:[#allocation3 + $0x18] sm:$0xff]
          %v495 = vld [vmem:[#allocation3 + $0x20] sm:$0xff]
          %v496 = vmul.f32 %v412, %v412
          %v497 = vmul.f32 %v414, %v414
          %v498 = vmul.f32 %v418, %v418
          %v499 = vmul.f32 %v420, %v420
          %v500 = vmul.f32 %v424, %v424
          %v501 = vmul.f32 %v426, %v426
          %v502 = vmul.f32 %v430, %v430
          %v503 = vmul.f32 %v432, %v432
          %v504 = vmul.f32 %v436, %v436
          %v505 = vmul.f32 %v438, %v438
          %v506 = vadd.f32 %v496, %v497
          %507 = vadd.xlane.f32.xlu0 %v506
          %v508 = vpop.xlane.xlu0 %507
          %v509 = vadd.f32 %v498, %v499
          %510 = vadd.xlane.f32.xlu0 %v509
          %v511 = vpop.xlane.xlu0 %510
          %v512 = vadd.f32 %v500, %v501
          %513 = vadd.xlane.f32.xlu0 %v512
          %v514 = vpop.xlane.xlu0 %513
          %v515 = vadd.f32 %v502, %v503
          %516 = vadd.xlane.f32.xlu0 %v515
          %v517 = vpop.xlane.xlu0 %516
          %v518 = vadd.f32 %v504, %v505
          %519 = vadd.xlane.f32.xlu0 %v518
          %v520 = vpop.xlane.xlu0 %519
          %v521 = vadd.f32 %v491, %v508
          %v522 = vadd.f32 %v492, %v511
          %v523 = vadd.f32 %v493, %v514
          %v524 = vadd.f32 %v494, %v517
          %v525 = vadd.f32 %v495, %v520
          %526 = vst.msk [vmem:[#allocation3] sm:$0xff] %vm485, %v521
          %527 = vst.msk [vmem:[#allocation3 + $0x8] sm:$0xff] %vm485, %v522
          %528 = vst.msk [vmem:[#allocation3 + $0x10] sm:$0xff] %vm485, %v523
          %529 = vst.msk [vmem:[#allocation3 + $0x18] sm:$0xff] %vm485, %v524
          %530 = vst.msk [vmem:[#allocation3 + $0x20] sm:$0xff] %vm485, %v525
        $region52: #{tpu_custom_call.1} parent=39 // pred_fallthru
          _
        %p531 = scmp.eq.s32.totalorder %s28, 1
        // Predicated region
        $region53: #{tpu_custom_call.1} parent=39 // pred_check
          %p532 = pneg %p531
        $region54: #{tpu_custom_call.1} parent=39 // pred_check_branch
          %534 = sbr.rel (%p532) target = $region56
        $region55: #{tpu_custom_call.1} parent=39 // pred_region
          %v535 = vld [vmem:[#allocation2] sm:$0xff]
          %v536 = vld [vmem:[#allocation2 + $0x8] sm:$0xff]
          %v537 = vld [vmem:[#allocation2 + $0x10] sm:$0xff]
          %v538 = vld [vmem:[#allocation2 + $0x18] sm:$0xff]
          %v539 = vld [vmem:[#allocation2 + $0x20] sm:$0xff]
          %v540 = vmul.f32 %v535, 0.00390625
          %v541 = vmul.f32 %v536, 0.00390625
          %v542 = vmul.f32 %v537, 0.00390625
          %v543 = vmul.f32 %v538, 0.00390625
          %v544 = vmul.f32 %v539, 0.00390625
          %v545 = vld [vmem:[#allocation3] sm:$0xff]
          %v546 = vld [vmem:[#allocation3 + $0x8] sm:$0xff]
          %v547 = vld [vmem:[#allocation3 + $0x10] sm:$0xff]
          %v548 = vld [vmem:[#allocation3 + $0x18] sm:$0xff]
          %v549 = vld [vmem:[#allocation3 + $0x20] sm:$0xff]
          %v550 = vmul.f32 %v545, 0.00390625
          %v551 = vmul.f32 %v546, 0.00390625
          %v552 = vmul.f32 %v547, 0.00390625
          %v553 = vmul.f32 %v548, 0.00390625
          %v554 = vmul.f32 %v549, 0.00390625
          %v555 = vmul.f32 %v540, %v540
          %v556 = vmul.f32 %v541, %v541
          %v557 = vmul.f32 %v542, %v542
          %v558 = vmul.f32 %v543, %v543
          %v559 = vmul.f32 %v544, %v544
          %v560 = vsub.f32 %v550, %v555
          %v561 = vsub.f32 %v551, %v556
          %v562 = vsub.f32 %v552, %v557
          %v563 = vsub.f32 %v553, %v558
          %v564 = vsub.f32 %v554, %v559
          %v565 = vmax.f32 %v560, 0.0
          %v566 = vmax.f32 %v561, 0.0
          %v567 = vmax.f32 %v562, 0.0
          %v568 = vmax.f32 %v563, 0.0
          %v569 = vmax.f32 %v564, 0.0
          %v570 = vadd.f32 %v565, 1e-05
          %v571 = vadd.f32 %v566, 1e-05
          %v572 = vadd.f32 %v567, 1e-05
          %v573 = vadd.f32 %v568, 1e-05
          %v574 = vadd.f32 %v569, 1e-05
          %v575 = vrsqrt.pop %v570
          %v576 = vrsqrt.pop %v571
          %v577 = vrsqrt.pop %v572
          %v578 = vrsqrt.pop %v573
          %v579 = vrsqrt.pop %v574
          %581 = vset.pattern.permute.xlu0 0
          %582 = vperm.xlu0 %581, %v540
          %v583 = vpop.permute.xlu0 %582
          %586 = vset.pattern.permute.xlu0 0
          %587 = vperm.xlu0 %586, %v541
          %v588 = vpop.permute.xlu0 %587
          %591 = vset.pattern.permute.xlu0 0
          %592 = vperm.xlu0 %591, %v542
          %v593 = vpop.permute.xlu0 %592
          %596 = vset.pattern.permute.xlu0 0
          %597 = vperm.xlu0 %596, %v543
          %v598 = vpop.permute.xlu0 %597
          %601 = vset.pattern.permute.xlu0 0
          %602 = vperm.xlu0 %601, %v544
          %v603 = vpop.permute.xlu0 %602
          %v605 = vsub.f32 %v412, %v583
          %v606 = vsub.f32 %v414, %v583
          %v607 = vsub.f32 %v418, %v588
          %v608 = vsub.f32 %v420, %v588
          %v609 = vsub.f32 %v424, %v593
          %v610 = vsub.f32 %v426, %v593
          %v611 = vsub.f32 %v430, %v598
          %v612 = vsub.f32 %v432, %v598
          %v613 = vsub.f32 %v436, %v603
          %v614 = vsub.f32 %v438, %v603
          %616 = vset.pattern.permute.xlu0 0
          %617 = vperm.xlu0 %616, %v575
          %v618 = vpop.permute.xlu0 %617
          %621 = vset.pattern.permute.xlu0 0
          %622 = vperm.xlu0 %621, %v576
          %v623 = vpop.permute.xlu0 %622
          %626 = vset.pattern.permute.xlu0 0
          %627 = vperm.xlu0 %626, %v577
          %v628 = vpop.permute.xlu0 %627
          %631 = vset.pattern.permute.xlu0 0
          %632 = vperm.xlu0 %631, %v578
          %v633 = vpop.permute.xlu0 %632
          %636 = vset.pattern.permute.xlu0 0
          %637 = vperm.xlu0 %636, %v579
          %v638 = vpop.permute.xlu0 %637
          %v640 = vmul.f32 %v605, %v618
          %v641 = vmul.f32 %v606, %v618
          %v642 = vmul.f32 %v607, %v623
          %v643 = vmul.f32 %v608, %v623
          %v644 = vmul.f32 %v609, %v628
          %v645 = vmul.f32 %v610, %v628
          %v646 = vmul.f32 %v611, %v633
          %v647 = vmul.f32 %v612, %v633
          %v648 = vmul.f32 %v613, %v638
          %v649 = vmul.f32 %v614, %v638
          %v650 = vmax.f32 %v640, 0.0
          %v651 = vmax.f32 %v641, 0.0
          %v652 = vmax.f32 %v642, 0.0
          %v653 = vmax.f32 %v643, 0.0
          %v654 = vmax.f32 %v644, 0.0
          %v655 = vmax.f32 %v645, 0.0
          %v656 = vmax.f32 %v646, 0.0
          %v657 = vmax.f32 %v647, 0.0
          %v658 = vmax.f32 %v648, 0.0
          %v659 = vmax.f32 %v649, 0.0
          %v660 = vld [vmem:[%s311] sm:$0xff]
          %v662 = vcombine.high %v660, %v660
          %vm664 = vcmask 1043456
          %v665 = vsel %vm664, %v660, 1.0
          %v666 = vsel %vm664, %v662, 1.0
          %v669 = vcombine.low %v665, %v666
          %v670 = vcombine.high %v665, %v666
          %v672 = vunpack.c.l.s4 1966171168
          %v673 = vunpack.c.0.s8 %v672
          %v674 = vlaneseq
          %v675 = vshrl.u32 %v674, 7
          %v676 = vsub.s32 %v673, %v675
          %v677 = vrot.slane %v669, %v676
          %v679 = vunpack.c.l.s4 1966171168
          %v680 = vunpack.c.0.s8 %v679
          %v681 = vlaneseq
          %v682 = vshrl.u32 %v681, 7
          %v683 = vsub.s32 %v680, %v682
          %v684 = vrot.slane %v670, %v683
          %v685 = vcombine.high %v677, %v677
          %v687 = vunpack.c.l.s4 1966171168
          %v688 = vunpack.c.0.s8 %v687
          %v689 = vlaneseq
          %v690 = vshrl.u32 %v689, 7
          %v691 = vsub.s32 %v688, %v690
          %v692 = vrot.slane %v677, %v691
          %v694 = vunpack.c.l.s4 1966171168
          %v695 = vunpack.c.0.s8 %v694
          %v696 = vlaneseq
          %v697 = vshrl.u32 %v696, 7
          %v698 = vsub.s32 %v695, %v697
          %v699 = vrot.slane %v684, %v698
          %v701 = vunpack.c.l.s4 1966171168
          %v702 = vunpack.c.0.s8 %v701
          %v703 = vlaneseq
          %v704 = vshrl.u32 %v703, 7
          %v705 = vsub.s32 %v702, %v704
          %v706 = vrot.slane %v685, %v705
          %v707 = vcombine.high %v692, %v692
          %v708 = vcombine.high %v706, %v706
          %v709 = vlaneseq
          %v710 = vshrl.u32 %v709, 7
          %v711 = vsub.s32 0, %v710
          %v712 = vrot.slane %v692, %v711
          %v713 = vlaneseq
          %v714 = vshrl.u32 %v713, 7
          %v715 = vsub.s32 1, %v714
          %v716 = vrot.slane %v692, %v715
          %v717 = vlaneseq
          %v718 = vshrl.u32 %v717, 7
          %v719 = vsub.s32 0, %v718
          %v720 = vrot.slane %v706, %v719
          %v721 = vlaneseq
          %v722 = vshrl.u32 %v721, 7
          %v723 = vsub.s32 1, %v722
          %v724 = vrot.slane %v706, %v723
          %v725 = vlaneseq
          %v726 = vshrl.u32 %v725, 7
          %v727 = vsub.s32 0, %v726
          %v728 = vrot.slane %v707, %v727
          %v729 = vlaneseq
          %v730 = vshrl.u32 %v729, 7
          %v731 = vsub.s32 1, %v730
          %v732 = vrot.slane %v707, %v731
          %v733 = vlaneseq
          %v734 = vshrl.u32 %v733, 7
          %v735 = vsub.s32 0, %v734
          %v736 = vrot.slane %v708, %v735
          %v737 = vlaneseq
          %v738 = vshrl.u32 %v737, 7
          %v739 = vsub.s32 1, %v738
          %v740 = vrot.slane %v708, %v739
          %v741 = vlaneseq
          %v742 = vshrl.u32 %v741, 7
          %v743 = vsub.s32 0, %v742
          %v744 = vrot.slane %v699, %v743
          %v745 = vlaneseq
          %v746 = vshrl.u32 %v745, 7
          %v747 = vsub.s32 1, %v746
          %v748 = vrot.slane %v699, %v747
          %v759 = vmul.f32 %v650, %v712
          %v760 = vmul.f32 %v651, %v716
          %v761 = vmul.f32 %v652, %v720
          %v762 = vmul.f32 %v653, %v724
          %v763 = vmul.f32 %v654, %v728
          %v764 = vmul.f32 %v655, %v732
          %v765 = vmul.f32 %v656, %v736
          %v766 = vmul.f32 %v657, %v740
          %v767 = vmul.f32 %v658, %v744
          %v768 = vmul.f32 %v659, %v748
          %v769 = vld [vmem:[%s3] sm:$0xff]
          %v770 = vld [vmem:[%s3 + $0x8] sm:$0xff]
          %v771 = vld [vmem:[%s3 + $0x10] sm:$0xff]
          %v772 = vld [vmem:[%s3 + $0x18] sm:$0xff]
          %v773 = vld [vmem:[%s4] sm:$0xff]
          %v774 = vld [vmem:[%s4 + $0x8] sm:$0xff]
          %v775 = vld [vmem:[%s4 + $0x10] sm:$0xff]
          %v776 = vld [vmem:[%s4 + $0x18] sm:$0xff]
          %778 = vset.pattern.permute.xlu0 0
          %779 = vperm.xlu0 %778, %v773
          %v780 = vpop.permute.xlu0 %779
          %783 = vset.pattern.permute.xlu0 0
          %784 = vperm.xlu0 %783, %v774
          %v785 = vpop.permute.xlu0 %784
          %788 = vset.pattern.permute.xlu0 0
          %789 = vperm.xlu0 %788, %v775
          %v790 = vpop.permute.xlu0 %789
          %793 = vset.pattern.permute.xlu0 0
          %794 = vperm.xlu0 %793, %v776
          %v795 = vpop.permute.xlu0 %794
          %vm797 = vcmask 326656
          %v799 = vsel %vm797, %v769, 0
          %v802 = vsel %vm797, %v770, 0
          %v805 = vsel %vm797, %v771, 0
          %v808 = vsel %vm797, %v772, 0
          %810 = vmatprep.subr.mxu0 %v760
          %811 = vmatpush1.msra.mxu0 %v759
          %812 = vmatprep.subr.mxu0 %v762
          %813 = vmatpush1.msra.mxu0 %v761
          %814 = vmatprep.subr.mxu0 %v764
          %815 = vmatpush1.msra.mxu0 %v763
          %816 = vmatprep.subr.mxu0 %v766
          %817 = vmatpush1.msra.mxu0 %v765
          %818 = vmatprep.subr.mxu0 %v768
          %819 = vmatpush1.msra.mxu0 %v767
          %820 = vmatprep.subr.mxu0 0.0
          %821 = vmatpush1.msra.mxu0 0.0
          %822 = vmatprep.subr.mxu0 0.0
          %823 = vmatpush1.msra.mxu0 0.0
          %824 = vmatprep.subr.mxu0 0.0
          %825 = vmatpush1.msra.mxu0 0.0
          %826 = vmatprep.subr.mxu0 0.0
          %827 = vmatpush1.msra.mxu0 0.0
          %828 = vmatprep.subr.mxu0 0.0
          %829 = vmatpush1.msra.mxu0 0.0
          %830 = vmatprep.subr.mxu0 0.0
          %831 = vmatpush1.msra.mxu0 0.0
          %832 = vmatprep.subr.mxu0 0.0
          %833 = vmatpush1.msra.mxu0 0.0
          %834 = vmatprep.subr.mxu0 0.0
          %835 = vmatpush1.msra.mxu0 0.0
          %836 = vmatprep.subr.mxu0 0.0
          %837 = vmatpush1.msra.mxu0 0.0
          %838 = vmatprep.subr.mxu0 0.0
          %839 = vmatpush1.msra.mxu0 0.0
          %840 = vmatprep.subr.mxu0 0.0
          %841 = vmatpush1.msra.mxu0 0.0
          %842 = vmatprep.subr.mxu0 0.0
          %843 = vmatpush1.msra.mxu0 0.0
          %844 = vmatprep.subr.mxu0 0.0
          %845 = vmatpush1.msra.mxu0 0.0
          %846 = vmatprep.subr.mxu0 0.0
          %847 = vmatpush1.msra.mxu0 0.0
          %848 = vmatprep.subr.mxu0 0.0
          %849 = vmatpush1.msra.mxu0 0.0
          %850 = vmatprep.subr.mxu0 0.0
          %851 = vmatpush1.msra.mxu0 0.0
          %852 = vmatprep.subr.mxu0 0.0
          %853 = vmatpush1.msra.mxu0 0.0
          %854 = vmatprep.subr.mxu0 0.0
          %855 = vmatpush1.msra.mxu0 0.0
          %856 = vmatprep.subr.mxu0 0.0
          %857 = vmatpush1.msra.mxu0 0.0
          %858 = vmatprep.subr.mxu0 0.0
          %859 = vmatpush1.msra.mxu0 0.0
          %860 = vmatprep.subr.mxu0 0.0
          %861 = vmatpush1.msra.mxu0 0.0
          %862 = vmatprep.subr.mxu0 0.0
          %863 = vmatpush1.msra.mxu0 0.0
          %864 = vmatprep.subr.mxu0 0.0
          %865 = vmatpush1.msra.mxu0 0.0
          %866 = vmatprep.subr.mxu0 0.0
          %867 = vmatpush1.msra.mxu0 0.0
          %868 = vmatprep.subr.mxu0 0.0
          %869 = vmatpush1.msra.mxu0 0.0
          %870 = vmatprep.subr.mxu0 0.0
          %871 = vmatpush1.msra.mxu0 0.0
          %872 = vmatprep.subr.mxu0 0.0
          %873 = vmatpush1.msra.mxu0 0.0
          %874 = vmatprep.mubr.f32.mxu0 0.0
          %875 = vmatmul.mubr.f32.gmra.mrb[0].mxu0 %v799
          %v876 = vpop.f32.mrb[0].mxu0
          %v877 = vadd.f32 %v780, %v876
          %v878 = vpop.f32.mrb[0].mxu0
          %v879 = vadd.f32 %v780, %v878
          %880 = vmatprep.mubr.f32.mxu0 0.0
          %881 = vmatmul.mubr.f32.gmra.mrb[0].mxu0 %v802
          %v882 = vpop.f32.mrb[0].mxu0
          %v883 = vadd.f32 %v785, %v882
          %v884 = vpop.f32.mrb[0].mxu0
          %v885 = vadd.f32 %v785, %v884
          %886 = vmatprep.mubr.f32.mxu0 0.0
          %887 = vmatmul.mubr.f32.gmra.mrb[0].mxu0 %v805
          %v888 = vpop.f32.mrb[0].mxu0
          %v889 = vadd.f32 %v790, %v888
          %v890 = vpop.f32.mrb[0].mxu0
          %v891 = vadd.f32 %v790, %v890
          %892 = vmatprep.mubr.f32.mxu0 0.0
          %893 = vmatmul.mubr.f32.gmra.mrb[0].mxu0 %v808
          %v894 = vpop.f32.mrb[0].mxu0
          %v895 = vadd.f32 %v795, %v894
          %v896 = vpop.f32.mrb[0].mxu0
          %v897 = vadd.f32 %v795, %v896
          %898 = vdwg.mxu0
          %v899 = vmax.f32 %v877, 0.0
          %v900 = vmax.f32 %v879, 0.0
          %v901 = vmax.f32 %v883, 0.0
          %v902 = vmax.f32 %v885, 0.0
          %v903 = vmax.f32 %v889, 0.0
          %v904 = vmax.f32 %v891, 0.0
          %v905 = vmax.f32 %v895, 0.0
          %v906 = vmax.f32 %v897, 0.0
          %907 = vst [vmem:[%s300] sm:$0xff] %v899
          %908 = vst [vmem:[%s300 + $0x8] sm:$0xff] %v900
          %909 = vst [vmem:[%s300 + $0x10] sm:$0xff] %v901
          %910 = vst [vmem:[%s300 + $0x18] sm:$0xff] %v902
          %911 = vst [vmem:[%s300 + $0x20] sm:$0xff] %v903
          %912 = vst [vmem:[%s300 + $0x28] sm:$0xff] %v904
          %913 = vst [vmem:[%s300 + $0x30] sm:$0xff] %v905
          %914 = vst [vmem:[%s300 + $0x38] sm:$0xff] %v906
        $region56: #{tpu_custom_call.1} parent=39 // pred_fallthru
          _
        %s915 = sand.u32 %s174, 1
        %s916 = scalar_lea.sflag [#allocation6], %s915
        %s917 = sand.u32 %s174, 1
        %s918 = smul.addr %s917, 64
        %s919 = scalar_lea.vmem [#allocation7], %s918
        // Predicated region
        $region57: #{tpu_custom_call.1} parent=39 // pred_check
          %p920 = pneg %p184
        $region58: #{tpu_custom_call.1} parent=39 // pred_check_branch
          %922 = sbr.rel (%p920) target = $region60
        $region59: #{tpu_custom_call.1} parent=39 // pred_region
          %s923 = smul.u32 %s29, %s28
          %s924 = smul.u32 2, %s923
          %s926 = ssub.s32 1024, 1024
          %927 = vsyncadd %s916, %s926
          %s928 = smul.addr %s27, 8
          %s929 = sadd.s32 %s924, %s928
          %s930 = smul.addr %s929, 128
          %s931 = scalar_lea.hbm %s5, %s930
          %s932 = sshll.u32 %s919, 4
          %s933 = int_to_ptr.vmem [resolvable:$true] %s932
          %938 = dma.vmem_to_hbm [thread:$0]  %s933, 1024, %s931, %s916, 256, 256, 16
        $region60: #{tpu_custom_call.1} parent=39 // pred_fallthru
          _
      $region40: #{tpu_custom_call.1} parent=5 // pred_fallthru
        _
      %p939 = scmp.le.s32.totalorder 2, %s17
      // Predicated region
      $region61: #{tpu_custom_call.1} parent=5 // pred_check
        %p940 = pneg %p939
      $region62: #{tpu_custom_call.1} parent=5 // pred_check_branch
        %942 = sbr.rel (%p940) target = $region64
      $region63: #{tpu_custom_call.1} parent=5 // pred_region
        %s943 = ssub.s32 %s17, 2
        // Predicated region
        $region65: #{tpu_custom_call.1} parent=63 // pred_check
          %p944 = pneg %p190
        $region66: #{tpu_custom_call.1} parent=63 // pred_check_branch
          %946 = sbr.rel (%p944) target = $region68
        $region67: #{tpu_custom_call.1} parent=63 // pred_region
          %s947 = sand.u32 %s175, 1
          %s948 = scalar_lea.sflag [#allocation6], %s947
          %s949 = sand.u32 %s175, 1
          %s950 = smul.addr %s949, 64
          %s951 = scalar_lea.vmem [#allocation7], %s950
          %952 = dma.done %s948, 1024
        $region68: #{tpu_custom_call.1} parent=63 // pred_fallthru
          _
      $region64: #{tpu_custom_call.1} parent=5 // pred_fallthru
        _
    $region6: #{tpu_custom_call.1} parent=1 // loop_footer
      %s21 = sadd.s32 1, %s17
    $region7: #{tpu_custom_call.1} parent=1 // loop_footer_branch
      %16 = sbr.rel target = $region3
    $region8: #{tpu_custom_call.1} parent=1 // loop_exit
      _
    %953 = vsyncpa [#allocation5], 1
    %s954 = scalar_lea.sflag [#allocation5], 1
    %955 = vsyncpa %s954, 1
    %956 = vsyncpa [#allocation6], 1
    %s957 = scalar_lea.sflag [#allocation6], 1
    %958 = vsyncpa %s957, 1

</llo_original>
